<compile_context>
chip_gen: v7x
topology: tpu7x:2x2x1
jax: 0.10.0
libtpu: 0.0.40
codegen_flags: <defaults>
</compile_context>

<pallas_src>
import jax
import jax.numpy as jnp
from jax import lax
from jax.experimental import pallas as pl
from jax.experimental.pallas import tpu as pltpu

C_IN, C_OUT, K = 3, 3, 3


def conv_avgpool_kernel(x_ref, r_ref, l_ref, b_ref, o_ref):
    # x_ref : (NB, H_pad, C_IN*W)      f32  sub-batch of images, channels fused into lanes
    # r_ref : (K, C_IN*W, CoWp_pad)    f32  conv kw taps + 2x2 W-pool folded (banded, lane-padded)
    # l_ref : (K, Hp_pad, H_pad)       f32  conv kh row shift + 2x2 H-pool folded (banded)
    # b_ref : (1, CoWp_pad)            f32  bias repeated per output-channel block (pad = 0)
    # o_ref : (NB, Hp_pad, CoWp_pad)   f32  pooled output, channels fused into lanes
    NB = x_ref.shape[0]
    n_kh, Hp_pad, _ = l_ref.shape
    CoWp_pad = r_ref.shape[-1]

    # Hoisted broadcast; no constant (iota/where) building inside the loops.
    bias_tile = jnp.broadcast_to(b_ref[...], (Hp_pad, CoWp_pad))

    @pl.loop(0, NB)
    def _(n):
        xn = x_ref[n]                        # (H_pad, 3W), loaded once per image
        o_ref[n] = bias_tile                 # init accumulator in VMEM output block
        for kh in range(n_kh):               # K = 3, unrolled
            # W side on the MXU: all 3 input channels + kw taps + W-pool in ONE matmul.
            a = jnp.dot(xn, r_ref[kh], preferred_element_type=jnp.float32)
            # H side on the MXU: kh row shift + H-pool; accumulate into o_ref directly.
            o_ref[n] = o_ref[n] + jnp.dot(l_ref[kh], a,
                                          preferred_element_type=jnp.float32)


def _round_up(v, m):
    return (v + m - 1) // m * m


def _plan(n, h_pad, hp_pad, w, cowp_pad):
    """Pick sub-batch size nb and an explicit VMEM limit from a generation-safe budget."""
    itemsize = 4
    cw = C_IN * w
    x_img = h_pad * cw * itemsize
    o_img = hp_pad * cowp_pad * itemsize
    # R + L + bias are grid-invariant and single-buffered (pl.Buffered(1)).
    fixed = (K * cw * cowp_pad + K * hp_pad * h_pad + 8 * cowp_pad) * itemsize
    per_img = 2 * (x_img + o_img)            # x / out tiles are double-buffered
    budget = 40 << 20                        # stays under v7x's 64 MiB physical VMEM
    target_x = 6 << 20                       # MiB-scale x tiles for the HBM roofline
    nb_vmem = max(1, (budget - fixed) // per_img) if fixed < budget else 1
    nb_target = max(1, target_x // x_img)
    nb_steps = max(1, n // min(8, n))        # keep >= min(8, N) grid steps (>=4 per v7x TC)
    nb = int(max(1, min(nb_vmem, nb_target, nb_steps, n, 64)))
    vmem_need = fixed + nb * per_img
    vmem_limit = int(min(64 << 20, max(32 << 20, vmem_need + (4 << 20))))
    return nb, vmem_limit


def combo_conv_avgpool(x, w, b, *, nb=None):
    """x: (N, 3, H, W) f32, w: (3, 3, 3, 3) f32 (OIHW), b: (3,) f32."""
    N, C, H, W = x.shape
    assert C == C_IN and H >= K and W >= K
    Hc, Wc = H - K + 1, W - K + 1
    Hp, Wp = Hc // 2, Wc // 2
    assert Hp >= 1 and Wp >= 1
    dt = jnp.float32
    x = x.astype(dt)

    CoWp = C_OUT * Wp
    CoWp_pad = _round_up(CoWp, 128)          # lane-dense stores / full MXU N
    H_pad = _round_up(H, 8)                  # sublane-aligned per-image slabs
    Hp_pad = _round_up(Hp, 8)
    CW = C_IN * W

    auto_nb, vmem_limit = _plan(N, H_pad, Hp_pad, W, CoWp_pad)
    if nb is None:
        nb = auto_nb
    G = pl.cdiv(N, nb)
    N_pad = G * nb

    # ---- wrapper-side layout plumbing ----
    # (N, C, H, W) -> zero-pad batch & rows -> (N_pad, H_pad, C, W) -> (N_pad, H_pad, C*W)
    xp = jnp.pad(x, ((0, N_pad - N), (0, 0), (0, H_pad - H), (0, 0)))
    xp = xp.transpose(0, 2, 1, 3).reshape(N_pad, H_pad, CW)

    # ---- host-side constant folding (hoisted out of the kernel) ----
    k_idx = jnp.arange(K)
    # masks[kw, j, s] = 1 where input column j feeds pooled column s through tap kw.
    dj = jnp.arange(W)[None, :, None] - k_idx[:, None, None]            # (K, W, 1)
    ss = jnp.arange(Wp)[None, None, :]                                  # (1, 1, Wp)
    masks = ((dj == 2 * ss) | (dj == 2 * ss + 1)).astype(dt)            # (K, W, Wp)
    # R[kh, ci*W + j, co*Wp + s] = sum_kw w[co, ci, kh, kw] * masks[kw, j, s]
    R = jnp.einsum('oihk,kjs->hijos', w.astype(dt), masks,
                   precision=lax.Precision.HIGHEST)                     # (K, C_IN, W, C_OUT, Wp)
    R = R.reshape(K, CW, CoWp)
    R = jnp.pad(R, ((0, 0), (0, 0), (0, CoWp_pad - CoWp)))              # lane pad (zeros)
    # L[kh, r, i] = 0.25 where input row i feeds pooled row r through tap kh.
    di = jnp.arange(H_pad)[None, None, :] - k_idx[:, None, None]        # (K, 1, H_pad)
    rr = jnp.arange(Hp_pad)[None, :, None]                              # (1, Hp_pad, 1)
    L = (((di == 2 * rr) | (di == 2 * rr + 1)) & (rr < Hp)).astype(dt) * 0.25
    bias_row = jnp.zeros((1, CoWp_pad), dt).at[0, :CoWp].set(
        jnp.repeat(b.astype(dt), Wp))

    # TODO(synk): for very large W (R is banded but stored dense, ~36*W*Wp bytes),
    # strip-mine W into 128/256-wide halo'd strips to keep MXU work O(W) and R in VMEM.

    out = pl.pallas_call(
        conv_avgpool_kernel,
        out_shape=jax.ShapeDtypeStruct((N_pad, Hp_pad, CoWp_pad), dt),
        grid=(G,),
        in_specs=[
            pl.BlockSpec((nb, H_pad, CW), lambda g: (g, 0, 0)),          # x (batch-blocked)
            pl.BlockSpec((K, CW, CoWp_pad), lambda g: (0, 0, 0),
                         pipeline_mode=pl.Buffered(1)),                  # R (resident, 1-buf)
            pl.BlockSpec((K, Hp_pad, H_pad), lambda g: (0, 0, 0),
                         pipeline_mode=pl.Buffered(1)),                  # L (resident, 1-buf)
            pl.BlockSpec((1, CoWp_pad), lambda g: (0, 0),
                         pipeline_mode=pl.Buffered(1)),                  # bias (resident, 1-buf)
        ],
        out_specs=pl.BlockSpec((nb, Hp_pad, CoWp_pad), lambda g: (g, 0, 0)),
        compiler_params=pltpu.CompilerParams(
            dimension_semantics=("parallel",),
            vmem_limit_bytes=vmem_limit),
    )(xp, R, L, bias_row)

    # Un-pack the lane-fused, padded output back to NCHW (wrapper-side layout plumbing).
    out = out[:N, :Hp, :CoWp].reshape(N, Hp, C_OUT, Wp).transpose(0, 2, 1, 3)
    return out


def ref_forward(x, w, b):
    """Plain-JAX reference matching PyTorch Conv2d(3,3,3) -> AvgPool2d(2,2)."""
    out = lax.conv_general_dilated(
        x, w, window_strides=(1, 1), padding="VALID",
        dimension_numbers=("NCHW", "OIHW", "NCHW"),
        precision=lax.Precision.HIGHEST)
    out = out + b.reshape(1, -1, 1, 1)
    N, C, Hc, Wc = out.shape
    Hp, Wp = Hc // 2, Wc // 2
    out = out[:, :, :2 * Hp, :2 * Wp].reshape(N, C, Hp, 2, Wp, 2).mean(axis=(3, 5))
    return out


if __name__ == "__main__":
    key = jax.random.PRNGKey(0)
    kx, kw_, kb, kx2, kx3 = jax.random.split(key, 5)

    # Deterministic Conv2d-style init (kaiming-uniform-ish bounds).
    fan_in = C_IN * K * K
    bound = 1.0 / (fan_in ** 0.5)
    w = jax.random.uniform(kw_, (C_OUT, C_IN, K, K), minval=-bound, maxval=bound,
                           dtype=jnp.float32)
    b = jax.random.uniform(kb, (C_OUT,), minval=-bound, maxval=bound,
                           dtype=jnp.float32)

    # Case 1: small batch, 16x16 spatial (3 input channels fixed by the module).
    x = jax.random.normal(kx, (8, 3, 16, 16), dtype=jnp.float32)
    out = jax.block_until_ready(combo_conv_avgpool(x, w, b))
    ref = jax.block_until_ready(ref_forward(x, w, b))
    assert out.shape == (8, 3, 7, 7), out.shape
    if not jnp.allclose(out, ref, atol=1e-4, rtol=1e-4):
        raise AssertionError("Pallas kernel does not match reference (case 1)")

    # Case 2: H not a multiple of 8 (exercises the row-padding / Hp-padding path).
    x2 = jax.random.normal(kx2, (3, 3, 22, 16), dtype=jnp.float32)
    out2 = jax.block_until_ready(combo_conv_avgpool(x2, w, b))
    ref2 = jax.block_until_ready(ref_forward(x2, w, b))
    assert out2.shape == (3, 3, 10, 7), out2.shape
    if not jnp.allclose(out2, ref2, atol=1e-4, rtol=1e-4):
        raise AssertionError("Pallas kernel does not match reference (case 2)")

    # Case 3: batch not divisible by the sub-batch (nb=2 -> padding path, multi-image step).
    x3 = jax.random.normal(kx3, (19, 3, 16, 16), dtype=jnp.float32)
    out3 = jax.block_until_ready(combo_conv_avgpool(x3, w, b))
    ref3 = jax.block_until_ready(ref_forward(x3, w, b))
    assert out3.shape == (19, 3, 7, 7), out3.shape
    if not jnp.allclose(out3, ref3, atol=1e-4, rtol=1e-4):
        raise AssertionError("Pallas kernel does not match reference (case 3)")

    print("KERNEL_OK")
</pallas_src>

<mosaic_0001>
module attributes {stable_mosaic.version = 11 : i64} {
  func.func @conv_avgpool_kernel(%arg0: i32, %arg1: memref<1x16x48xf32, #tpu.memory_space<vmem>>, %arg2: memref<3x48x128xf32, #tpu.memory_space<vmem>>, %arg3: memref<3x8x16xf32, #tpu.memory_space<vmem>>, %arg4: memref<1x128xf32, #tpu.memory_space<vmem>>, %arg5: memref<1x8x128xf32, #tpu.memory_space<vmem>>) attributes {dimension_semantics = [#tpu.dimension_semantics<parallel>], iteration_bounds = array<i64: 8>, scalar_prefetch = 0 : i64, scratch_operands = 0 : i64, tpu.core_type = #tpu.core_type<tc>, window_params = [{transform_indices = @transform_0, window_bounds = array<i64: 1, 16, 48>}, {pipeline_mode = #tpu.pipeline_mode<synchronous>, transform_indices = @transform_1, window_bounds = array<i64: 3, 48, 128>}, {pipeline_mode = #tpu.pipeline_mode<synchronous>, transform_indices = @transform_2, window_bounds = array<i64: 3, 8, 16>}, {pipeline_mode = #tpu.pipeline_mode<synchronous>, transform_indices = @transform_3, window_bounds = array<i64: 1, 128>}, {transform_indices = @transform_4, window_bounds = array<i64: 1, 8, 128>}]} {
    %c0 = arith.constant 0 : index
    %c0_0 = arith.constant 0 : index
    %0 = vector.load %arg4[%c0, %c0_0] : memref<1x128xf32, #tpu.memory_space<vmem>>, vector<1x128xf32>
    %1 = vector.shape_cast %0 : vector<1x128xf32> to vector<1x128xf32>
    %2 = vector.broadcast %1 : vector<1x128xf32> to vector<8x128xf32>
    %c0_i32 = arith.constant 0 : i32
    %c1_i32 = arith.constant 1 : i32
    %3 = arith.muli %c0_i32, %c1_i32 : i32
    %c0_i32_1 = arith.constant 0 : i32
    %4 = arith.addi %c0_i32_1, %3 : i32
    %5 = arith.index_cast %4 : i32 to index
    %c0_2 = arith.constant 0 : index
    %c0_3 = arith.constant 0 : index
    %6 = vector.load %arg1[%5, %c0_2, %c0_3] : memref<1x16x48xf32, #tpu.memory_space<vmem>>, vector<1x16x48xf32>
    %7 = vector.shape_cast %6 : vector<1x16x48xf32> to vector<16x48xf32>
    %8 = arith.index_cast %4 : i32 to index
    %c0_4 = arith.constant 0 : index
    %c0_5 = arith.constant 0 : index
    %9 = vector.load %arg5[%8, %c0_4, %c0_5] : memref<1x8x128xf32, #tpu.memory_space<vmem>>, vector<1x8x128xf32>
    %10 = vector.shape_cast %9 : vector<1x8x128xf32> to vector<8x128xf32>
    %11 = vector.shape_cast %2 : vector<8x128xf32> to vector<1x8x128xf32>
    tpu.vector_store %arg5[%8, %c0_4, %c0_5], %11 {strides = array<i32>} : memref<1x8x128xf32, #tpu.memory_space<vmem>>, vector<1x8x128xf32>,
    %c0_6 = arith.constant 0 : index
    %c0_7 = arith.constant 0 : index
    %c0_8 = arith.constant 0 : index
    %12 = vector.load %arg2[%c0_6, %c0_7, %c0_8] : memref<3x48x128xf32, #tpu.memory_space<vmem>>, vector<1x48x128xf32>
    %13 = vector.shape_cast %12 : vector<1x48x128xf32> to vector<48x128xf32>
    %cst = arith.constant dense<0.000000e+00> : vector<16x128xf32>
    %14 = tpu.matmul %7, %13, %cst {dimension_numbers = #tpu.dot_dimension_numbers<[1], [0], [0], [1], [0, 0, 1, 1], [], []>} : vector<16x48xf32>, vector<48x128xf32>, vector<16x128xf32> -> vector<16x128xf32>
    %15 = arith.index_cast %4 : i32 to index
    %c0_9 = arith.constant 0 : index
    %c0_10 = arith.constant 0 : index
    %16 = vector.load %arg5[%15, %c0_9, %c0_10] : memref<1x8x128xf32, #tpu.memory_space<vmem>>, vector<1x8x128xf32>
    %17 = vector.shape_cast %16 : vector<1x8x128xf32> to vector<8x128xf32>
    %c0_11 = arith.constant 0 : index
    %c0_12 = arith.constant 0 : index
    %c0_13 = arith.constant 0 : index
    %18 = vector.load %arg3[%c0_11, %c0_12, %c0_13] : memref<3x8x16xf32, #tpu.memory_space<vmem>>, vector<1x8x16xf32>
    %19 = vector.shape_cast %18 : vector<1x8x16xf32> to vector<8x16xf32>
    %cst_14 = arith.constant dense<0.000000e+00> : vector<8x128xf32>
    %20 = tpu.matmul %19, %14, %cst_14 {dimension_numbers = #tpu.dot_dimension_numbers<[1], [0], [0], [1], [0, 0, 1, 1], [], []>} : vector<8x16xf32>, vector<16x128xf32>, vector<8x128xf32> -> vector<8x128xf32>
    %21 = arith.addf %17, %20 : vector<8x128xf32>
    %22 = arith.index_cast %4 : i32 to index
    %c0_15 = arith.constant 0 : index
    %c0_16 = arith.constant 0 : index
    %23 = vector.load %arg5[%22, %c0_15, %c0_16] : memref<1x8x128xf32, #tpu.memory_space<vmem>>, vector<1x8x128xf32>
    %24 = vector.shape_cast %23 : vector<1x8x128xf32> to vector<8x128xf32>
    %25 = vector.shape_cast %21 : vector<8x128xf32> to vector<1x8x128xf32>
    tpu.vector_store %arg5[%22, %c0_15, %c0_16], %25 {strides = array<i32>} : memref<1x8x128xf32, #tpu.memory_space<vmem>>, vector<1x8x128xf32>,
    %c1 = arith.constant 1 : index
    %c0_17 = arith.constant 0 : index
    %c0_18 = arith.constant 0 : index
    %26 = vector.load %arg2[%c1, %c0_17, %c0_18] : memref<3x48x128xf32, #tpu.memory_space<vmem>>, vector<1x48x128xf32>
    %27 = vector.shape_cast %26 : vector<1x48x128xf32> to vector<48x128xf32>
    %cst_19 = arith.constant dense<0.000000e+00> : vector<16x128xf32>
    %28 = tpu.matmul %7, %27, %cst_19 {dimension_numbers = #tpu.dot_dimension_numbers<[1], [0], [0], [1], [0, 0, 1, 1], [], []>} : vector<16x48xf32>, vector<48x128xf32>, vector<16x128xf32> -> vector<16x128xf32>
    %29 = arith.index_cast %4 : i32 to index
    %c0_20 = arith.constant 0 : index
    %c0_21 = arith.constant 0 : index
    %30 = vector.load %arg5[%29, %c0_20, %c0_21] : memref<1x8x128xf32, #tpu.memory_space<vmem>>, vector<1x8x128xf32>
    %31 = vector.shape_cast %30 : vector<1x8x128xf32> to vector<8x128xf32>
    %c1_22 = arith.constant 1 : index
    %c0_23 = arith.constant 0 : index
    %c0_24 = arith.constant 0 : index
    %32 = vector.load %arg3[%c1_22, %c0_23, %c0_24] : memref<3x8x16xf32, #tpu.memory_space<vmem>>, vector<1x8x16xf32>
    %33 = vector.shape_cast %32 : vector<1x8x16xf32> to vector<8x16xf32>
    %cst_25 = arith.constant dense<0.000000e+00> : vector<8x128xf32>
    %34 = tpu.matmul %33, %28, %cst_25 {dimension_numbers = #tpu.dot_dimension_numbers<[1], [0], [0], [1], [0, 0, 1, 1], [], []>} : vector<8x16xf32>, vector<16x128xf32>, vector<8x128xf32> -> vector<8x128xf32>
    %35 = arith.addf %31, %34 : vector<8x128xf32>
    %36 = arith.index_cast %4 : i32 to index
    %c0_26 = arith.constant 0 : index
    %c0_27 = arith.constant 0 : index
    %37 = vector.load %arg5[%36, %c0_26, %c0_27] : memref<1x8x128xf32, #tpu.memory_space<vmem>>, vector<1x8x128xf32>
    %38 = vector.shape_cast %37 : vector<1x8x128xf32> to vector<8x128xf32>
    %39 = vector.shape_cast %35 : vector<8x128xf32> to vector<1x8x128xf32>
    tpu.vector_store %arg5[%36, %c0_26, %c0_27], %39 {strides = array<i32>} : memref<1x8x128xf32, #tpu.memory_space<vmem>>, vector<1x8x128xf32>,
    %c2 = arith.constant 2 : index
    %c0_28 = arith.constant 0 : index
    %c0_29 = arith.constant 0 : index
    %40 = vector.load %arg2[%c2, %c0_28, %c0_29] : memref<3x48x128xf32, #tpu.memory_space<vmem>>, vector<1x48x128xf32>
    %41 = vector.shape_cast %40 : vector<1x48x128xf32> to vector<48x128xf32>
    %cst_30 = arith.constant dense<0.000000e+00> : vector<16x128xf32>
    %42 = tpu.matmul %7, %41, %cst_30 {dimension_numbers = #tpu.dot_dimension_numbers<[1], [0], [0], [1], [0, 0, 1, 1], [], []>} : vector<16x48xf32>, vector<48x128xf32>, vector<16x128xf32> -> vector<16x128xf32>
    %43 = arith.index_cast %4 : i32 to index
    %c0_31 = arith.constant 0 : index
    %c0_32 = arith.constant 0 : index
    %44 = vector.load %arg5[%43, %c0_31, %c0_32] : memref<1x8x128xf32, #tpu.memory_space<vmem>>, vector<1x8x128xf32>
    %45 = vector.shape_cast %44 : vector<1x8x128xf32> to vector<8x128xf32>
    %c2_33 = arith.constant 2 : index
    %c0_34 = arith.constant 0 : index
    %c0_35 = arith.constant 0 : index
    %46 = vector.load %arg3[%c2_33, %c0_34, %c0_35] : memref<3x8x16xf32, #tpu.memory_space<vmem>>, vector<1x8x16xf32>
    %47 = vector.shape_cast %46 : vector<1x8x16xf32> to vector<8x16xf32>
    %cst_36 = arith.constant dense<0.000000e+00> : vector<8x128xf32>
    %48 = tpu.matmul %47, %42, %cst_36 {dimension_numbers = #tpu.dot_dimension_numbers<[1], [0], [0], [1], [0, 0, 1, 1], [], []>} : vector<8x16xf32>, vector<16x128xf32>, vector<8x128xf32> -> vector<8x128xf32>
    %49 = arith.addf %45, %48 : vector<8x128xf32>
    %50 = arith.index_cast %4 : i32 to index
    %c0_37 = arith.constant 0 : index
    %c0_38 = arith.constant 0 : index
    %51 = vector.load %arg5[%50, %c0_37, %c0_38] : memref<1x8x128xf32, #tpu.memory_space<vmem>>, vector<1x8x128xf32>
    %52 = vector.shape_cast %51 : vector<1x8x128xf32> to vector<8x128xf32>
    %53 = vector.shape_cast %49 : vector<8x128xf32> to vector<1x8x128xf32>
    tpu.vector_store %arg5[%50, %c0_37, %c0_38], %53 {strides = array<i32>} : memref<1x8x128xf32, #tpu.memory_space<vmem>>, vector<1x8x128xf32>,
    %c1_i32_39 = arith.constant 1 : i32
    return
  }
  func.func @transform_0(%arg0: i32) -> (i32, i32, i32) {
    %c0_i32 = arith.constant 0 : i32
    %c0_i32_0 = arith.constant 0 : i32
    %c0_i32_1 = arith.constant 0 : i32
    return %arg0, %c0_i32, %c0_i32_0 : i32, i32, i32
  }
  func.func @transform_1(%arg0: i32) -> (i32, i32, i32) {
    %c0_i32 = arith.constant 0 : i32
    %c0_i32_0 = arith.constant 0 : i32
    %c0_i32_1 = arith.constant 0 : i32
    %c0_i32_2 = arith.constant 0 : i32
    return %c0_i32, %c0_i32_0, %c0_i32_1 : i32, i32, i32
  }
  func.func @transform_2(%arg0: i32) -> (i32, i32, i32) {
    %c0_i32 = arith.constant 0 : i32
    %c0_i32_0 = arith.constant 0 : i32
    %c0_i32_1 = arith.constant 0 : i32
    %c0_i32_2 = arith.constant 0 : i32
    return %c0_i32, %c0_i32_0, %c0_i32_1 : i32, i32, i32
  }
  func.func @transform_3(%arg0: i32) -> (i32, i32) {
    %c0_i32 = arith.constant 0 : i32
    %c0_i32_0 = arith.constant 0 : i32
    %c0_i32_1 = arith.constant 0 : i32
    return %c0_i32, %c0_i32_0 : i32, i32
  }
  func.func @transform_4(%arg0: i32) -> (i32, i32, i32) {
    %c0_i32 = arith.constant 0 : i32
    %c0_i32_0 = arith.constant 0 : i32
    %c0_i32_1 = arith.constant 0 : i32
    return %arg0, %c0_i32, %c0_i32_0 : i32, i32, i32
  }
}

</mosaic_0001>

<llo_original>
// kernel: tpu_custom_call.1
$region0: #{tpu_custom_call.1}
  #allocation0 [shape = 'u32[]', space=smem, size = 0x4, offset = 0x4, fixed_abs, tag = 'smem constant byte address 0x4 - core index']
  #allocation1 [shape = 'u32[144,128]{1,0:T(1,128)}', space=vmem, size = 0x12000, scoped, tag = 'internal scratch']
  %s0 = inlined_call_operand.hbm [shape: f32[8,16,48], index: 0, kind: input, shape index: {}]
  %s1 = inlined_call_operand.hbm [shape: f32[3,48,128], index: 1, kind: input, shape index: {}]
  %s2 = inlined_call_operand.hbm [shape: f32[3,8,16], index: 2, kind: input, shape index: {}]
  %s3 = inlined_call_operand.vmem [shape: f32[1,128], index: 3, kind: input, shape index: {}]
  %s4 = inlined_call_operand.hbm [shape: f32[8,8,128], index: 4, kind: output, shape index: {}]
  %s5 = sld [smem:[#allocation0]]
  $region61: #{tpu_custom_call.1} parent=0
    _
  %s7 = ssub.s32 1, %s5
  %s8 = scalar_select 0, %s7, %s5
  $region1: #{tpu_custom_call.1} parent=0
    #allocation2 [shape = 'u8[16384]{0}', space=vmem, size = 0x4000, scoped, tag = 'input window, operand 0']
    #allocation3 [shape = 's32[2]{0}', space=sflag, size = 0x8, scoped, tag = 'scoped memory for tpu_custom_call.1']
    #allocation4 [shape = 's32[2]{0}', space=sflag, size = 0x8, scoped, tag = 'scoped memory for tpu_custom_call.1']
    #allocation5 [shape = 'u8[73728]{0}', space=vmem, size = 0x12000, scoped, tag = 'input window, operand 1, single buffered']
    #allocation6 [shape = 's32[1]{0}', space=sflag, size = 0x4, scoped, tag = 'scoped memory for tpu_custom_call.1']
    #allocation7 [shape = 'u8[12288]{0}', space=vmem, size = 0x3000, scoped, tag = 'input window, operand 2, single buffered']
    #allocation8 [shape = 'u8[8192]{0}', space=vmem, size = 0x2000, scoped, tag = 'output window, operand 0']
    %9 = vsyncpa [#allocation3], 0
    %s10 = scalar_lea.sflag [#allocation3], 1
    %11 = vsyncpa %s10, 0
    %12 = vsyncpa [#allocation6], 0
    %13 = vsyncpa [#allocation4], 0
    %s14 = scalar_lea.sflag [#allocation4], 1
    %15 = vsyncpa %s14, 0
    loop: start=0, step=1, limit=10
    $region2: #{tpu_custom_call.1} parent=1 // loop_pre_header
      _
    $region3: #{tpu_custom_call.1} parent=1 // loop_header
      %s17 = sphi 0, %s21
      %p18 = scmp.ge.s32.totalorder %s17, 10
      %s27 = sphi 0, %s29
      %s30 = sphi 0, %s27
      %s31 = sphi 0, %s30
      %s47 = sphi 0, %s31
      %s51 = sphi 0, %s51
      %s53 = sphi 0, %s51
      %s54 = sphi 0, %s53
      %s68 = sphi 0, %s54
      %s72 = sphi 0, %s72
      %s74 = sphi 0, %s72
      %s75 = sphi 0, %s74
      %s89 = sphi 0, %s75
      %s93 = sphi 0, %s93
      %s95 = sphi 0, %s93
      %s96 = sphi 0, %s95
      %s110 = sphi 0, %s96
      %s116 = sphi 0, %s118
      %s119 = sphi 0, %s116
      %s120 = sphi 0, %s119
      %s136 = sphi 0, %s120
    $region4: #{tpu_custom_call.1} parent=1 // loop_header_branch
      %20 = sbr.rel (%p18) target = $region8
    $region5: #{tpu_custom_call.1} parent=1 // loop_body
      %s22 = ssub.s32 %s17, 1
      %s23 = ssub.s32 %s17, 2
      %s24 = sadd.s32 %s17, 1
      %s25 = ssub.s32 %s17, %s24
      %p26 = scmp.eq.s32.totalorder %s25, 0
      %s28 = sadd.s32 %s27, 1
      %s29 = scalar_select %p26, %s27, %s28
      %p32 = pneg %p26
      %p33 = scmp.eq.s32.totalorder %s17, 7
      %p34 = por %p32, %p33
      %p35 = scmp.ne.s32.totalorder %s27, %s30
      %p36 = scmp.eq.s32.totalorder %s17, 0
      %p37 = por %p35, %p36
      %p38 = scmp.ne.s32.totalorder %s27, %s30
      %p39 = scmp.eq.s32.totalorder %s22, 7
      %p40 = por %p38, %p39
      %p41 = scmp.ne.s32.totalorder %s30, %s31
      %p42 = scmp.eq.s32.totalorder %s22, 0
      %p43 = por %p41, %p42
      %p44 = scmp.ne.s32.totalorder %s30, %s31
      %p45 = scmp.eq.s32.totalorder %s23, 7
      %p46 = por %p44, %p45
      %p48 = scmp.ne.s32.totalorder %s31, %s47
      %p49 = scmp.eq.s32.totalorder %s23, 0
      %p50 = por %p48, %p49
      %s52 = sadd.s32 %s51, 1
      %p55 = scmp.eq.s32.totalorder %s17, 7
      %p56 = scmp.ne.s32.totalorder %s51, %s53
      %p57 = scmp.eq.s32.totalorder %s17, 0
      %p58 = por %p56, %p57
      %p59 = scmp.ne.s32.totalorder %s51, %s53
      %p60 = scmp.eq.s32.totalorder %s22, 7
      %p61 = por %p59, %p60
      %p62 = scmp.ne.s32.totalorder %s53, %s54
      %p63 = scmp.eq.s32.totalorder %s22, 0
      %p64 = por %p62, %p63
      %p65 = scmp.ne.s32.totalorder %s53, %s54
      %p66 = scmp.eq.s32.totalorder %s23, 7
      %p67 = por %p65, %p66
      %p69 = scmp.ne.s32.totalorder %s54, %s68
      %p70 = scmp.eq.s32.totalorder %s23, 0
      %p71 = por %p69, %p70
      %s73 = sadd.s32 %s72, 1
      %p76 = scmp.eq.s32.totalorder %s17, 7
      %p77 = scmp.ne.s32.totalorder %s72, %s74
      %p78 = scmp.eq.s32.totalorder %s17, 0
      %p79 = por %p77, %p78
      %p80 = scmp.ne.s32.totalorder %s72, %s74
      %p81 = scmp.eq.s32.totalorder %s22, 7
      %p82 = por %p80, %p81
      %p83 = scmp.ne.s32.totalorder %s74, %s75
      %p84 = scmp.eq.s32.totalorder %s22, 0
      %p85 = por %p83, %p84
      %p86 = scmp.ne.s32.totalorder %s74, %s75
      %p87 = scmp.eq.s32.totalorder %s23, 7
      %p88 = por %p86, %p87
      %p90 = scmp.ne.s32.totalorder %s75, %s89
      %p91 = scmp.eq.s32.totalorder %s23, 0
      %p92 = por %p90, %p91
      %s94 = sadd.s32 %s93, 1
      %p97 = scmp.eq.s32.totalorder %s17, 7
      %p98 = scmp.ne.s32.totalorder %s93, %s95
      %p99 = scmp.eq.s32.totalorder %s17, 0
      %p100 = por %p98, %p99
      %p101 = scmp.ne.s32.totalorder %s93, %s95
      %p102 = scmp.eq.s32.totalorder %s22, 7
      %p103 = por %p101, %p102
      %p104 = scmp.ne.s32.totalorder %s95, %s96
      %p105 = scmp.eq.s32.totalorder %s22, 0
      %p106 = por %p104, %p105
      %p107 = scmp.ne.s32.totalorder %s95, %s96
      %p108 = scmp.eq.s32.totalorder %s23, 7
      %p109 = por %p107, %p108
      %p111 = scmp.ne.s32.totalorder %s96, %s110
      %p112 = scmp.eq.s32.totalorder %s23, 0
      %p113 = por %p111, %p112
      %s114 = ssub.s32 %s17, %s24
      %p115 = scmp.eq.s32.totalorder %s114, 0
      %s117 = sadd.s32 %s116, 1
      %s118 = scalar_select %p115, %s116, %s117
      %p121 = pneg %p115
      %p122 = scmp.eq.s32.totalorder %s17, 7
      %p123 = por %p121, %p122
      %p124 = scmp.ne.s32.totalorder %s116, %s119
      %p125 = scmp.eq.s32.totalorder %s17, 0
      %p126 = por %p124, %p125
      %p127 = scmp.ne.s32.totalorder %s116, %s119
      %p128 = scmp.eq.s32.totalorder %s22, 7
      %p129 = por %p127, %p128
      %p130 = scmp.ne.s32.totalorder %s119, %s120
      %p131 = scmp.eq.s32.totalorder %s22, 0
      %p132 = por %p130, %p131
      %p133 = scmp.ne.s32.totalorder %s119, %s120
      %p134 = scmp.eq.s32.totalorder %s23, 7
      %p135 = por %p133, %p134
      %p137 = scmp.ne.s32.totalorder %s120, %s136
      %p138 = scmp.eq.s32.totalorder %s23, 0
      %p139 = por %p137, %p138
      %p140 = scmp.le.s32.totalorder 1, %s17
      %p141 = scmp.lt.s32.totalorder %s17, 9
      %p142 = pnand %p140, %p141
      %p143 = pneg %p142
      // Predicated region
      $region9: #{tpu_custom_call.1} parent=5 // pred_check
        _
      $region10: #{tpu_custom_call.1} parent=5 // pred_check_branch
        %145 = sbr.rel (%p142) target = $region12
      $region11: #{tpu_custom_call.1} parent=5 // pred_region
        %s146 = ssub.s32 %s17, 1
        // Predicated region
        $region13: #{tpu_custom_call.1} parent=11 // pred_check
          %p147 = pneg %p64
        $region14: #{tpu_custom_call.1} parent=11 // pred_check_branch
          %149 = sbr.rel (%p147) target = $region16
        $region15: #{tpu_custom_call.1} parent=11 // pred_region
          %s151 = ssub.s32 2304, 2304
          %152 = vsyncadd [#allocation6], %s151
          %s153 = sshll.u32 [#allocation5], 4
          %s154 = int_to_ptr.vmem [resolvable:$true] %s153
          %159 = dma.hbm_to_vmem [thread:$0]  %s1, 2304, %s154, [#allocation6], 128, 128, 8
        $region16: #{tpu_custom_call.1} parent=11 // pred_fallthru
          _
        // Predicated region
        $region17: #{tpu_custom_call.1} parent=11 // pred_check
          %p160 = pneg %p85
        $region18: #{tpu_custom_call.1} parent=11 // pred_check_branch
          %162 = sbr.rel (%p160) target = $region20
        $region19: #{tpu_custom_call.1} parent=11 // pred_region
          %s164 = ssub.s32 384, 384
          %165 = vsyncadd [#allocation6], %s164
          %s166 = sshll.u32 [#allocation7], 4
          %s167 = int_to_ptr.vmem [resolvable:$true] %s166
          %172 = dma.hbm_to_vmem [thread:$0]  %s2, 384, %s167, [#allocation6], 128, 128, 8
        $region20: #{tpu_custom_call.1} parent=11 // pred_fallthru
          _
        // Predicated region
        $region21: #{tpu_custom_call.1} parent=11 // pred_check
          %p173 = pneg %p106
        $region22: #{tpu_custom_call.1} parent=11 // pred_check_branch
          %175 = sbr.rel (%p173) target = $region24
        $region23: #{tpu_custom_call.1} parent=11 // pred_region
          _
        $region24: #{tpu_custom_call.1} parent=11 // pred_fallthru
          _
      $region12: #{tpu_custom_call.1} parent=5 // pred_fallthru
        _
      %p176 = scmp.lt.s32.totalorder %s17, 8
      // Predicated region
      $region25: #{tpu_custom_call.1} parent=5 // pred_check
        %p177 = pneg %p176
      $region26: #{tpu_custom_call.1} parent=5 // pred_check_branch
        %179 = sbr.rel (%p177) target = $region28
      $region27: #{tpu_custom_call.1} parent=5 // pred_region
        // Predicated region
        $region29: #{tpu_custom_call.1} parent=27 // pred_check
          %p180 = pneg %p37
        $region30: #{tpu_custom_call.1} parent=27 // pred_check_branch
          %182 = sbr.rel (%p180) target = $region32
        $region31: #{tpu_custom_call.1} parent=27 // pred_region
          %s183 = sand.u32 %s27, 1
          %s184 = scalar_lea.sflag [#allocation3], %s183
          %s185 = sand.u32 %s27, 1
          %s186 = smul.addr %s185, 16
          %s187 = scalar_lea.vmem [#allocation2], %s186
          %s189 = ssub.s32 256, 256
          %190 = vsyncadd %s184, %s189
          %s191 = smul.addr %s17, 2
          %s192 = smul.addr %s191, 128
          %s193 = scalar_lea.hbm %s0, %s192
          %s194 = sshll.u32 %s187, 4
          %s195 = int_to_ptr.vmem [resolvable:$true] %s194
          %200 = dma.hbm_to_vmem [thread:$0]  %s193, 256, %s195, %s184, 128, 128, 8
        $region32: #{tpu_custom_call.1} parent=27 // pred_fallthru
          _
      $region28: #{tpu_custom_call.1} parent=5 // pred_fallthru
        _
      %p201 = scmp.le.s32.totalorder 1, %s17
      %p202 = scmp.lt.s32.totalorder %s17, 9
      %p203 = pnand %p201, %p202
      %p204 = pneg %p203
      // Predicated region
      $region33: #{tpu_custom_call.1} parent=5 // pred_check
        _
      $region34: #{tpu_custom_call.1} parent=5 // pred_check_branch
        %206 = sbr.rel (%p203) target = $region36
      $region35: #{tpu_custom_call.1} parent=5 // pred_region
        %s207 = ssub.s32 %s17, 1
        %s208 = sand.u32 %s30, 1
        %s209 = scalar_lea.sflag [#allocation3], %s208
        %s210 = sand.u32 %s30, 1
        %s211 = smul.addr %s210, 16
        %s212 = scalar_lea.vmem [#allocation2], %s211
        // Predicated region
        $region37: #{tpu_custom_call.1} parent=35 // pred_check
          %p213 = pneg %p43
        $region38: #{tpu_custom_call.1} parent=35 // pred_check_branch
          %215 = sbr.rel (%p213) target = $region40
        $region39: #{tpu_custom_call.1} parent=35 // pred_region
          %216 = dma.done %s209, 256
        $region40: #{tpu_custom_call.1} parent=35 // pred_fallthru
          _
        // Predicated region
        $region41: #{tpu_custom_call.1} parent=35 // pred_check
          %p217 = pneg %p64
        $region42: #{tpu_custom_call.1} parent=35 // pred_check_branch
          %219 = sbr.rel (%p217) target = $region44
        $region43: #{tpu_custom_call.1} parent=35 // pred_region
          %220 = dma.done [#allocation6], 2304
        $region44: #{tpu_custom_call.1} parent=35 // pred_fallthru
          _
        // Predicated region
        $region45: #{tpu_custom_call.1} parent=35 // pred_check
          %p221 = pneg %p85
        $region46: #{tpu_custom_call.1} parent=35 // pred_check_branch
          %223 = sbr.rel (%p221) target = $region48
        $region47: #{tpu_custom_call.1} parent=35 // pred_region
          %224 = dma.done [#allocation6], 384
        $region48: #{tpu_custom_call.1} parent=35 // pred_fallthru
          _
        %s225 = sand.u32 %s30, 1
        %s226 = scalar_lea.sflag [#allocation3], %s225
        %s227 = sand.u32 %s30, 1
        %s228 = smul.addr %s227, 16
        %s229 = scalar_lea.vmem [#allocation2], %s228
        %p230 = pneg %p43
        %p231 = pneg %p40
        %p232 = pneg %p64
        %p233 = pneg %p61
        %p234 = pneg %p85
        %p235 = pneg %p82
        %p236 = pneg %p106
        %p237 = pneg %p103
        %p238 = pneg %p132
        %p239 = pneg %p129
        %s240 = sand.u32 %s119, 1
        %s241 = scalar_lea.sflag [#allocation4], %s240
        %s242 = sand.u32 %s119, 1
        %s243 = smul.addr %s242, 8
        %s244 = scalar_lea.vmem [#allocation8], %s243
        %v245 = vld [vmem:[%s3] sm:$0x1]
        %v246 = vld [vmem:[%s212] sm:$0xff]
        %v247 = vld [vmem:[%s212 + $0x8] sm:$0xff]
        %v249 = vlaneseq
        %v250 = vshrl.u32 %v249, 7
        %v251 = vsub.s32 0, %v250
        %v252 = vrot.slane %v245, %v251
        %254 = vst [vmem:[%s244] sm:$0xff] %v252
        %v255 = vld [vmem:[#allocation5] sm:$0xff]
        %v256 = vld [vmem:[#allocation5 + $0x8] sm:$0xff]
        %v257 = vld [vmem:[#allocation5 + $0x10] sm:$0xff]
        %v258 = vld [vmem:[#allocation5 + $0x18] sm:$0xff]
        %v259 = vld [vmem:[#allocation5 + $0x20] sm:$0xff]
        %v260 = vld [vmem:[#allocation5 + $0x28] sm:$0xff]
        %vm261 = vcmask 392192
        %v263 = vsel %vm261, %v246, 0
        %v266 = vsel %vm261, %v247, 0
        %268 = vmatprep.subr.mxu0 0.0
        %269 = vmatpush1.msra.mxu0 %v255
        %270 = vmatprep.subr.mxu0 0.0
        %271 = vmatpush1.msra.mxu0 %v256
        %272 = vmatprep.subr.mxu0 0.0
        %273 = vmatpush1.msra.mxu0 %v257
        %274 = vmatprep.subr.mxu0 0.0
        %275 = vmatpush1.msra.mxu0 %v258
        %276 = vmatprep.subr.mxu0 0.0
        %277 = vmatpush1.msra.mxu0 %v259
        %278 = vmatprep.subr.mxu0 0.0
        %279 = vmatpush1.msra.mxu0 %v260
        %280 = vmatprep.subr.mxu0 0.0
        %281 = vmatpush1.msra.mxu0 0.0
        %282 = vmatprep.subr.mxu0 0.0
        %283 = vmatpush1.msra.mxu0 0.0
        %284 = vmatprep.subr.mxu0 0.0
        %285 = vmatpush1.msra.mxu0 0.0
        %286 = vmatprep.subr.mxu0 0.0
        %287 = vmatpush1.msra.mxu0 0.0
        %288 = vmatprep.subr.mxu0 0.0
        %289 = vmatpush1.msra.mxu0 0.0
        %290 = vmatprep.subr.mxu0 0.0
        %291 = vmatpush1.msra.mxu0 0.0
        %292 = vmatprep.subr.mxu0 0.0
        %293 = vmatpush1.msra.mxu0 0.0
        %294 = vmatprep.subr.mxu0 0.0
        %295 = vmatpush1.msra.mxu0 0.0
        %296 = vmatprep.subr.mxu0 0.0
        %297 = vmatpush1.msra.mxu0 0.0
        %298 = vmatprep.subr.mxu0 0.0
        %299 = vmatpush1.msra.mxu0 0.0
        %300 = vmatprep.subr.mxu0 0.0
        %301 = vmatpush1.msra.mxu0 0.0
        %302 = vmatprep.subr.mxu0 0.0
        %303 = vmatpush1.msra.mxu0 0.0
        %304 = vmatprep.subr.mxu0 0.0
        %305 = vmatpush1.msra.mxu0 0.0
        %306 = vmatprep.subr.mxu0 0.0
        %307 = vmatpush1.msra.mxu0 0.0
        %308 = vmatprep.subr.mxu0 0.0
        %309 = vmatpush1.msra.mxu0 0.0
        %310 = vmatprep.subr.mxu0 0.0
        %311 = vmatpush1.msra.mxu0 0.0
        %312 = vmatprep.subr.mxu0 0.0
        %313 = vmatpush1.msra.mxu0 0.0
        %314 = vmatprep.subr.mxu0 0.0
        %315 = vmatpush1.msra.mxu0 0.0
        %316 = vmatprep.subr.mxu0 0.0
        %317 = vmatpush1.msra.mxu0 0.0
        %318 = vmatprep.subr.mxu0 0.0
        %319 = vmatpush1.msra.mxu0 0.0
        %320 = vmatprep.subr.mxu0 0.0
        %321 = vmatpush1.msra.mxu0 0.0
        %322 = vmatprep.subr.mxu0 0.0
        %323 = vmatpush1.msra.mxu0 0.0
        %324 = vmatprep.subr.mxu0 0.0
        %325 = vmatpush1.msra.mxu0 0.0
        %326 = vmatprep.subr.mxu0 0.0
        %327 = vmatpush1.msra.mxu0 0.0
        %328 = vmatprep.subr.mxu0 0.0
        %329 = vmatpush1.msra.mxu0 0.0
        %330 = vmatprep.subr.mxu0 0.0
        %331 = vmatpush1.msra.mxu0 0.0
        %332 = vmatprep.mubr.f32.mxu0 0.0
        %333 = vmatmul.mubr.f32.gmra.mrb[0].mxu0 %v263
        %v334 = vpop.f32.mrb[0].mxu0
        %v335 = vadd.f32 0.0, %v334
        %v336 = vpop.f32.mrb[0].mxu0
        %337 = vmatprep.mubr.f32.mxu0 0.0
        %338 = vmatmul.mubr.f32.gmra.mrb[0].mxu0 %v266
        %v339 = vpop.f32.mrb[0].mxu0
        %v340 = vadd.f32 0.0, %v339
        %v341 = vpop.f32.mrb[0].mxu0
        %342 = vdwg.mxu0
        %v343 = vld [vmem:[%s244] sm:$0xff]
        %v344 = vld [vmem:[#allocation7] sm:$0xff]
        %vm345 = vcmask 130048
        %v347 = vsel %vm345, %v344, 0
        %349 = vmatprep.subr.mxu0 0.0
        %350 = vmatpush1.msra.mxu0 %v335
        %351 = vmatprep.subr.mxu0 0.0
        %352 = vmatpush1.msra.mxu0 %v340
        %353 = vmatprep.subr.mxu0 0.0
        %354 = vmatpush1.msra.mxu0 0.0
        %355 = vmatprep.subr.mxu0 0.0
        %356 = vmatpush1.msra.mxu0 0.0
        %357 = vmatprep.subr.mxu0 0.0
        %358 = vmatpush1.msra.mxu0 0.0
        %359 = vmatprep.subr.mxu0 0.0
        %360 = vmatpush1.msra.mxu0 0.0
        %361 = vmatprep.subr.mxu0 0.0
        %362 = vmatpush1.msra.mxu0 0.0
        %363 = vmatprep.subr.mxu0 0.0
        %364 = vmatpush1.msra.mxu0 0.0
        %365 = vmatprep.subr.mxu0 0.0
        %366 = vmatpush1.msra.mxu0 0.0
        %367 = vmatprep.subr.mxu0 0.0
        %368 = vmatpush1.msra.mxu0 0.0
        %369 = vmatprep.subr.mxu0 0.0
        %370 = vmatpush1.msra.mxu0 0.0
        %371 = vmatprep.subr.mxu0 0.0
        %372 = vmatpush1.msra.mxu0 0.0
        %373 = vmatprep.subr.mxu0 0.0
        %374 = vmatpush1.msra.mxu0 0.0
        %375 = vmatprep.subr.mxu0 0.0
        %376 = vmatpush1.msra.mxu0 0.0
        %377 = vmatprep.subr.mxu0 0.0
        %378 = vmatpush1.msra.mxu0 0.0
        %379 = vmatprep.subr.mxu0 0.0
        %380 = vmatpush1.msra.mxu0 0.0
        %381 = vmatprep.subr.mxu0 0.0
        %382 = vmatpush1.msra.mxu0 0.0
        %383 = vmatprep.subr.mxu0 0.0
        %384 = vmatpush1.msra.mxu0 0.0
        %385 = vmatprep.subr.mxu0 0.0
        %386 = vmatpush1.msra.mxu0 0.0
        %387 = vmatprep.subr.mxu0 0.0
        %388 = vmatpush1.msra.mxu0 0.0
        %389 = vmatprep.subr.mxu0 0.0
        %390 = vmatpush1.msra.mxu0 0.0
        %391 = vmatprep.subr.mxu0 0.0
        %392 = vmatpush1.msra.mxu0 0.0
        %393 = vmatprep.subr.mxu0 0.0
        %394 = vmatpush1.msra.mxu0 0.0
        %395 = vmatprep.subr.mxu0 0.0
        %396 = vmatpush1.msra.mxu0 0.0
        %397 = vmatprep.subr.mxu0 0.0
        %398 = vmatpush1.msra.mxu0 0.0
        %399 = vmatprep.subr.mxu0 0.0
        %400 = vmatpush1.msra.mxu0 0.0
        %401 = vmatprep.subr.mxu0 0.0
        %402 = vmatpush1.msra.mxu0 0.0
        %403 = vmatprep.subr.mxu0 0.0
        %404 = vmatpush1.msra.mxu0 0.0
        %405 = vmatprep.subr.mxu0 0.0
        %406 = vmatpush1.msra.mxu0 0.0
        %407 = vmatprep.subr.mxu0 0.0
        %408 = vmatpush1.msra.mxu0 0.0
        %409 = vmatprep.subr.mxu0 0.0
        %410 = vmatpush1.msra.mxu0 0.0
        %411 = vmatprep.subr.mxu0 0.0
        %412 = vmatpush1.msra.mxu0 0.0
        %413 = vmatprep.mubr.f32.mxu0 0.0
        %414 = vmatmul.mubr.f32.gmra.mrb[0].mxu0 %v347
        %v415 = vpop.f32.mrb[0].mxu0
        %v416 = vadd.f32 0.0, %v415
        %v417 = vpop.f32.mrb[0].mxu0
        %418 = vdwg.mxu0
        %v419 = vadd.f32 %v343, %v416
        %420 = vst [vmem:[%s244] sm:$0xff] %v419
        %s421 = scalar_lea.vmem [#allocation5], 48
        %v422 = vld [vmem:[%s421] sm:$0xff]
        %v423 = vld [vmem:[%s421 + $0x8] sm:$0xff]
        %v424 = vld [vmem:[%s421 + $0x10] sm:$0xff]
        %v425 = vld [vmem:[%s421 + $0x18] sm:$0xff]
        %v426 = vld [vmem:[%s421 + $0x20] sm:$0xff]
        %v427 = vld [vmem:[%s421 + $0x28] sm:$0xff]
        %428 = vmatprep.subr.mxu0 0.0
        %429 = vmatpush1.msra.mxu0 %v422
        %430 = vmatprep.subr.mxu0 0.0
        %431 = vmatpush1.msra.mxu0 %v423
        %432 = vmatprep.subr.mxu0 0.0
        %433 = vmatpush1.msra.mxu0 %v424
        %434 = vmatprep.subr.mxu0 0.0
        %435 = vmatpush1.msra.mxu0 %v425
        %436 = vmatprep.subr.mxu0 0.0
        %437 = vmatpush1.msra.mxu0 %v426
        %438 = vmatprep.subr.mxu0 0.0
        %439 = vmatpush1.msra.mxu0 %v427
        %440 = vmatprep.subr.mxu0 0.0
        %441 = vmatpush1.msra.mxu0 0.0
        %442 = vmatprep.subr.mxu0 0.0
        %443 = vmatpush1.msra.mxu0 0.0
        %444 = vmatprep.subr.mxu0 0.0
        %445 = vmatpush1.msra.mxu0 0.0
        %446 = vmatprep.subr.mxu0 0.0
        %447 = vmatpush1.msra.mxu0 0.0
        %448 = vmatprep.subr.mxu0 0.0
        %449 = vmatpush1.msra.mxu0 0.0
        %450 = vmatprep.subr.mxu0 0.0
        %451 = vmatpush1.msra.mxu0 0.0
        %452 = vmatprep.subr.mxu0 0.0
        %453 = vmatpush1.msra.mxu0 0.0
        %454 = vmatprep.subr.mxu0 0.0
        %455 = vmatpush1.msra.mxu0 0.0
        %456 = vmatprep.subr.mxu0 0.0
        %457 = vmatpush1.msra.mxu0 0.0
        %458 = vmatprep.subr.mxu0 0.0
        %459 = vmatpush1.msra.mxu0 0.0
        %460 = vmatprep.subr.mxu0 0.0
        %461 = vmatpush1.msra.mxu0 0.0
        %462 = vmatprep.subr.mxu0 0.0
        %463 = vmatpush1.msra.mxu0 0.0
        %464 = vmatprep.subr.mxu0 0.0
        %465 = vmatpush1.msra.mxu0 0.0
        %466 = vmatprep.subr.mxu0 0.0
        %467 = vmatpush1.msra.mxu0 0.0
        %468 = vmatprep.subr.mxu0 0.0
        %469 = vmatpush1.msra.mxu0 0.0
        %470 = vmatprep.subr.mxu0 0.0
        %471 = vmatpush1.msra.mxu0 0.0
        %472 = vmatprep.subr.mxu0 0.0
        %473 = vmatpush1.msra.mxu0 0.0
        %474 = vmatprep.subr.mxu0 0.0
        %475 = vmatpush1.msra.mxu0 0.0
        %476 = vmatprep.subr.mxu0 0.0
        %477 = vmatpush1.msra.mxu0 0.0
        %478 = vmatprep.subr.mxu0 0.0
        %479 = vmatpush1.msra.mxu0 0.0
        %480 = vmatprep.subr.mxu0 0.0
        %481 = vmatpush1.msra.mxu0 0.0
        %482 = vmatprep.subr.mxu0 0.0
        %483 = vmatpush1.msra.mxu0 0.0
        %484 = vmatprep.subr.mxu0 0.0
        %485 = vmatpush1.msra.mxu0 0.0
        %486 = vmatprep.subr.mxu0 0.0
        %487 = vmatpush1.msra.mxu0 0.0
        %488 = vmatprep.subr.mxu0 0.0
        %489 = vmatpush1.msra.mxu0 0.0
        %490 = vmatprep.subr.mxu0 0.0
        %491 = vmatpush1.msra.mxu0 0.0
        %492 = vmatprep.mubr.f32.mxu0 0.0
        %493 = vmatmul.mubr.f32.gmra.mrb[0].mxu0 %v263
        %v494 = vpop.f32.mrb[0].mxu0
        %v495 = vadd.f32 0.0, %v494
        %v496 = vpop.f32.mrb[0].mxu0
        %497 = vmatprep.mubr.f32.mxu0 0.0
        %498 = vmatmul.mubr.f32.gmra.mrb[0].mxu0 %v266
        %v499 = vpop.f32.mrb[0].mxu0
        %v500 = vadd.f32 0.0, %v499
        %v501 = vpop.f32.mrb[0].mxu0
        %502 = vdwg.mxu0
        %v503 = vld [vmem:[%s244] sm:$0xff]
        %s504 = scalar_lea.vmem [#allocation7], 8
        %v505 = vld [vmem:[%s504] sm:$0xff]
        %v507 = vsel %vm345, %v505, 0
        %509 = vmatprep.subr.mxu0 0.0
        %510 = vmatpush1.msra.mxu0 %v495
        %511 = vmatprep.subr.mxu0 0.0
        %512 = vmatpush1.msra.mxu0 %v500
        %513 = vmatprep.subr.mxu0 0.0
        %514 = vmatpush1.msra.mxu0 0.0
        %515 = vmatprep.subr.mxu0 0.0
        %516 = vmatpush1.msra.mxu0 0.0
        %517 = vmatprep.subr.mxu0 0.0
        %518 = vmatpush1.msra.mxu0 0.0
        %519 = vmatprep.subr.mxu0 0.0
        %520 = vmatpush1.msra.mxu0 0.0
        %521 = vmatprep.subr.mxu0 0.0
        %522 = vmatpush1.msra.mxu0 0.0
        %523 = vmatprep.subr.mxu0 0.0
        %524 = vmatpush1.msra.mxu0 0.0
        %525 = vmatprep.subr.mxu0 0.0
        %526 = vmatpush1.msra.mxu0 0.0
        %527 = vmatprep.subr.mxu0 0.0
        %528 = vmatpush1.msra.mxu0 0.0
        %529 = vmatprep.subr.mxu0 0.0
        %530 = vmatpush1.msra.mxu0 0.0
        %531 = vmatprep.subr.mxu0 0.0
        %532 = vmatpush1.msra.mxu0 0.0
        %533 = vmatprep.subr.mxu0 0.0
        %534 = vmatpush1.msra.mxu0 0.0
        %535 = vmatprep.subr.mxu0 0.0
        %536 = vmatpush1.msra.mxu0 0.0
        %537 = vmatprep.subr.mxu0 0.0
        %538 = vmatpush1.msra.mxu0 0.0
        %539 = vmatprep.subr.mxu0 0.0
        %540 = vmatpush1.msra.mxu0 0.0
        %541 = vmatprep.subr.mxu0 0.0
        %542 = vmatpush1.msra.mxu0 0.0
        %543 = vmatprep.subr.mxu0 0.0
        %544 = vmatpush1.msra.mxu0 0.0
        %545 = vmatprep.subr.mxu0 0.0
        %546 = vmatpush1.msra.mxu0 0.0
        %547 = vmatprep.subr.mxu0 0.0
        %548 = vmatpush1.msra.mxu0 0.0
        %549 = vmatprep.subr.mxu0 0.0
        %550 = vmatpush1.msra.mxu0 0.0
        %551 = vmatprep.subr.mxu0 0.0
        %552 = vmatpush1.msra.mxu0 0.0
        %553 = vmatprep.subr.mxu0 0.0
        %554 = vmatpush1.msra.mxu0 0.0
        %555 = vmatprep.subr.mxu0 0.0
        %556 = vmatpush1.msra.mxu0 0.0
        %557 = vmatprep.subr.mxu0 0.0
        %558 = vmatpush1.msra.mxu0 0.0
        %559 = vmatprep.subr.mxu0 0.0
        %560 = vmatpush1.msra.mxu0 0.0
        %561 = vmatprep.subr.mxu0 0.0
        %562 = vmatpush1.msra.mxu0 0.0
        %563 = vmatprep.subr.mxu0 0.0
        %564 = vmatpush1.msra.mxu0 0.0
        %565 = vmatprep.subr.mxu0 0.0
        %566 = vmatpush1.msra.mxu0 0.0
        %567 = vmatprep.subr.mxu0 0.0
        %568 = vmatpush1.msra.mxu0 0.0
        %569 = vmatprep.subr.mxu0 0.0
        %570 = vmatpush1.msra.mxu0 0.0
        %571 = vmatprep.subr.mxu0 0.0
        %572 = vmatpush1.msra.mxu0 0.0
        %573 = vmatprep.mubr.f32.mxu0 0.0
        %574 = vmatmul.mubr.f32.gmra.mrb[0].mxu0 %v507
        %v575 = vpop.f32.mrb[0].mxu0
        %v576 = vadd.f32 0.0, %v575
        %v577 = vpop.f32.mrb[0].mxu0
        %578 = vdwg.mxu0
        %v579 = vadd.f32 %v503, %v576
        %580 = vst [vmem:[%s244] sm:$0xff] %v579
        %s581 = scalar_lea.vmem [#allocation5], 96
        %v582 = vld [vmem:[%s581] sm:$0xff]
        %v583 = vld [vmem:[%s581 + $0x8] sm:$0xff]
        %v584 = vld [vmem:[%s581 + $0x10] sm:$0xff]
        %v585 = vld [vmem:[%s581 + $0x18] sm:$0xff]
        %v586 = vld [vmem:[%s581 + $0x20] sm:$0xff]
        %v587 = vld [vmem:[%s581 + $0x28] sm:$0xff]
        %588 = vmatprep.subr.mxu0 0.0
        %589 = vmatpush1.msra.mxu0 %v582
        %590 = vmatprep.subr.mxu0 0.0
        %591 = vmatpush1.msra.mxu0 %v583
        %592 = vmatprep.subr.mxu0 0.0
        %593 = vmatpush1.msra.mxu0 %v584
        %594 = vmatprep.subr.mxu0 0.0
        %595 = vmatpush1.msra.mxu0 %v585
        %596 = vmatprep.subr.mxu0 0.0
        %597 = vmatpush1.msra.mxu0 %v586
        %598 = vmatprep.subr.mxu0 0.0
        %599 = vmatpush1.msra.mxu0 %v587
        %600 = vmatprep.subr.mxu0 0.0
        %601 = vmatpush1.msra.mxu0 0.0
        %602 = vmatprep.subr.mxu0 0.0
        %603 = vmatpush1.msra.mxu0 0.0
        %604 = vmatprep.subr.mxu0 0.0
        %605 = vmatpush1.msra.mxu0 0.0
        %606 = vmatprep.subr.mxu0 0.0
        %607 = vmatpush1.msra.mxu0 0.0
        %608 = vmatprep.subr.mxu0 0.0
        %609 = vmatpush1.msra.mxu0 0.0
        %610 = vmatprep.subr.mxu0 0.0
        %611 = vmatpush1.msra.mxu0 0.0
        %612 = vmatprep.subr.mxu0 0.0
        %613 = vmatpush1.msra.mxu0 0.0
        %614 = vmatprep.subr.mxu0 0.0
        %615 = vmatpush1.msra.mxu0 0.0
        %616 = vmatprep.subr.mxu0 0.0
        %617 = vmatpush1.msra.mxu0 0.0
        %618 = vmatprep.subr.mxu0 0.0
        %619 = vmatpush1.msra.mxu0 0.0
        %620 = vmatprep.subr.mxu0 0.0
        %621 = vmatpush1.msra.mxu0 0.0
        %622 = vmatprep.subr.mxu0 0.0
        %623 = vmatpush1.msra.mxu0 0.0
        %624 = vmatprep.subr.mxu0 0.0
        %625 = vmatpush1.msra.mxu0 0.0
        %626 = vmatprep.subr.mxu0 0.0
        %627 = vmatpush1.msra.mxu0 0.0
        %628 = vmatprep.subr.mxu0 0.0
        %629 = vmatpush1.msra.mxu0 0.0
        %630 = vmatprep.subr.mxu0 0.0
        %631 = vmatpush1.msra.mxu0 0.0
        %632 = vmatprep.subr.mxu0 0.0
        %633 = vmatpush1.msra.mxu0 0.0
        %634 = vmatprep.subr.mxu0 0.0
        %635 = vmatpush1.msra.mxu0 0.0
        %636 = vmatprep.subr.mxu0 0.0
        %637 = vmatpush1.msra.mxu0 0.0
        %638 = vmatprep.subr.mxu0 0.0
        %639 = vmatpush1.msra.mxu0 0.0
        %640 = vmatprep.subr.mxu0 0.0
        %641 = vmatpush1.msra.mxu0 0.0
        %642 = vmatprep.subr.mxu0 0.0
        %643 = vmatpush1.msra.mxu0 0.0
        %644 = vmatprep.subr.mxu0 0.0
        %645 = vmatpush1.msra.mxu0 0.0
        %646 = vmatprep.subr.mxu0 0.0
        %647 = vmatpush1.msra.mxu0 0.0
        %648 = vmatprep.subr.mxu0 0.0
        %649 = vmatpush1.msra.mxu0 0.0
        %650 = vmatprep.subr.mxu0 0.0
        %651 = vmatpush1.msra.mxu0 0.0
        %652 = vmatprep.mubr.f32.mxu0 0.0
        %653 = vmatmul.mubr.f32.gmra.mrb[0].mxu0 %v263
        %v654 = vpop.f32.mrb[0].mxu0
        %v655 = vadd.f32 0.0, %v654
        %v656 = vpop.f32.mrb[0].mxu0
        %657 = vmatprep.mubr.f32.mxu0 0.0
        %658 = vmatmul.mubr.f32.gmra.mrb[0].mxu0 %v266
        %v659 = vpop.f32.mrb[0].mxu0
        %v660 = vadd.f32 0.0, %v659
        %v661 = vpop.f32.mrb[0].mxu0
        %662 = vdwg.mxu0
        %v663 = vld [vmem:[%s244] sm:$0xff]
        %s664 = scalar_lea.vmem [#allocation7], 16
        %v665 = vld [vmem:[%s664] sm:$0xff]
        %v667 = vsel %vm345, %v665, 0
        %669 = vmatprep.subr.mxu0 0.0
        %670 = vmatpush1.msra.mxu0 %v655
        %671 = vmatprep.subr.mxu0 0.0
        %672 = vmatpush1.msra.mxu0 %v660
        %673 = vmatprep.subr.mxu0 0.0
        %674 = vmatpush1.msra.mxu0 0.0
        %675 = vmatprep.subr.mxu0 0.0
        %676 = vmatpush1.msra.mxu0 0.0
        %677 = vmatprep.subr.mxu0 0.0
        %678 = vmatpush1.msra.mxu0 0.0
        %679 = vmatprep.subr.mxu0 0.0
        %680 = vmatpush1.msra.mxu0 0.0
        %681 = vmatprep.subr.mxu0 0.0
        %682 = vmatpush1.msra.mxu0 0.0
        %683 = vmatprep.subr.mxu0 0.0
        %684 = vmatpush1.msra.mxu0 0.0
        %685 = vmatprep.subr.mxu0 0.0
        %686 = vmatpush1.msra.mxu0 0.0
        %687 = vmatprep.subr.mxu0 0.0
        %688 = vmatpush1.msra.mxu0 0.0
        %689 = vmatprep.subr.mxu0 0.0
        %690 = vmatpush1.msra.mxu0 0.0
        %691 = vmatprep.subr.mxu0 0.0
        %692 = vmatpush1.msra.mxu0 0.0
        %693 = vmatprep.subr.mxu0 0.0
        %694 = vmatpush1.msra.mxu0 0.0
        %695 = vmatprep.subr.mxu0 0.0
        %696 = vmatpush1.msra.mxu0 0.0
        %697 = vmatprep.subr.mxu0 0.0
        %698 = vmatpush1.msra.mxu0 0.0
        %699 = vmatprep.subr.mxu0 0.0
        %700 = vmatpush1.msra.mxu0 0.0
        %701 = vmatprep.subr.mxu0 0.0
        %702 = vmatpush1.msra.mxu0 0.0
        %703 = vmatprep.subr.mxu0 0.0
        %704 = vmatpush1.msra.mxu0 0.0
        %705 = vmatprep.subr.mxu0 0.0
        %706 = vmatpush1.msra.mxu0 0.0
        %707 = vmatprep.subr.mxu0 0.0
        %708 = vmatpush1.msra.mxu0 0.0
        %709 = vmatprep.subr.mxu0 0.0
        %710 = vmatpush1.msra.mxu0 0.0
        %711 = vmatprep.subr.mxu0 0.0
        %712 = vmatpush1.msra.mxu0 0.0
        %713 = vmatprep.subr.mxu0 0.0
        %714 = vmatpush1.msra.mxu0 0.0
        %715 = vmatprep.subr.mxu0 0.0
        %716 = vmatpush1.msra.mxu0 0.0
        %717 = vmatprep.subr.mxu0 0.0
        %718 = vmatpush1.msra.mxu0 0.0
        %719 = vmatprep.subr.mxu0 0.0
        %720 = vmatpush1.msra.mxu0 0.0
        %721 = vmatprep.subr.mxu0 0.0
        %722 = vmatpush1.msra.mxu0 0.0
        %723 = vmatprep.subr.mxu0 0.0
        %724 = vmatpush1.msra.mxu0 0.0
        %725 = vmatprep.subr.mxu0 0.0
        %726 = vmatpush1.msra.mxu0 0.0
        %727 = vmatprep.subr.mxu0 0.0
        %728 = vmatpush1.msra.mxu0 0.0
        %729 = vmatprep.subr.mxu0 0.0
        %730 = vmatpush1.msra.mxu0 0.0
        %731 = vmatprep.subr.mxu0 0.0
        %732 = vmatpush1.msra.mxu0 0.0
        %733 = vmatprep.mubr.f32.mxu0 0.0
        %734 = vmatmul.mubr.f32.gmra.mrb[0].mxu0 %v667
        %v735 = vpop.f32.mrb[0].mxu0
        %v736 = vadd.f32 0.0, %v735
        %v737 = vpop.f32.mrb[0].mxu0
        %738 = vdwg.mxu0
        %v739 = vadd.f32 %v663, %v736
        %740 = vst [vmem:[%s244] sm:$0xff] %v739
        %s741 = sand.u32 %s119, 1
        %s742 = scalar_lea.sflag [#allocation4], %s741
        %s743 = sand.u32 %s119, 1
        %s744 = smul.addr %s743, 8
        %s745 = scalar_lea.vmem [#allocation8], %s744
        // Predicated region
        $region49: #{tpu_custom_call.1} parent=35 // pred_check
          %p746 = pneg %p129
        $region50: #{tpu_custom_call.1} parent=35 // pred_check_branch
          %748 = sbr.rel (%p746) target = $region52
        $region51: #{tpu_custom_call.1} parent=35 // pred_region
          %s750 = ssub.s32 128, 128
          %751 = vsyncadd %s742, %s750
          %s752 = smul.addr %s22, 128
          %s753 = scalar_lea.hbm %s4, %s752
          %s755 = sshll.u32 %s745, 4
          %s756 = int_to_ptr.vmem [resolvable:$true] %s755
          %758 = dma.vmem_to_hbm [thread:$0]  %s756, 128, %s753, %s742
        $region52: #{tpu_custom_call.1} parent=35 // pred_fallthru
          _
      $region36: #{tpu_custom_call.1} parent=5 // pred_fallthru
        _
      %p759 = scmp.le.s32.totalorder 2, %s17
      // Predicated region
      $region53: #{tpu_custom_call.1} parent=5 // pred_check
        %p760 = pneg %p759
      $region54: #{tpu_custom_call.1} parent=5 // pred_check_branch
        %762 = sbr.rel (%p760) target = $region56
      $region55: #{tpu_custom_call.1} parent=5 // pred_region
        %s763 = ssub.s32 %s17, 2
        // Predicated region
        $region57: #{tpu_custom_call.1} parent=55 // pred_check
          %p764 = pneg %p135
        $region58: #{tpu_custom_call.1} parent=55 // pred_check_branch
          %766 = sbr.rel (%p764) target = $region60
        $region59: #{tpu_custom_call.1} parent=55 // pred_region
          %s767 = sand.u32 %s120, 1
          %s768 = scalar_lea.sflag [#allocation4], %s767
          %s769 = sand.u32 %s120, 1
          %s770 = smul.addr %s769, 8
          %s771 = scalar_lea.vmem [#allocation8], %s770
          %772 = dma.done %s768, 128
        $region60: #{tpu_custom_call.1} parent=55 // pred_fallthru
          _
      $region56: #{tpu_custom_call.1} parent=5 // pred_fallthru
        _
    $region6: #{tpu_custom_call.1} parent=1 // loop_footer
      %s21 = sadd.s32 1, %s17
    $region7: #{tpu_custom_call.1} parent=1 // loop_footer_branch
      %16 = sbr.rel target = $region3
    $region8: #{tpu_custom_call.1} parent=1 // loop_exit
      _
    %773 = vsyncpa [#allocation3], 1
    %s774 = scalar_lea.sflag [#allocation3], 1
    %775 = vsyncpa %s774, 1
    %776 = vsyncpa [#allocation6], 1
    %777 = vsyncpa [#allocation4], 1
    %s778 = scalar_lea.sflag [#allocation4], 1
    %779 = vsyncpa %s778, 1

</llo_original>
